<compile_context>
chip_gen: v7x
topology: tpu7x:2x2x1
jax: 0.10.0
libtpu: 0.0.40
codegen_flags: <defaults>
</compile_context>

<pallas_src>
import functools

import jax
import jax.numpy as jnp
import numpy as np
from jax.experimental import pallas as pl
from jax.experimental.pallas import tpu as pltpu

_LANE = 128


def _layernorm(h, gamma, beta, eps=1e-5):
    mu = jnp.mean(h, axis=-1, keepdims=True)
    var = jnp.mean((h - mu) * (h - mu), axis=-1, keepdims=True)
    return (h - mu) * jax.lax.rsqrt(var + eps) * gamma + beta


def drug_embed_kernel(
    xm_ref,      # [N, F+G] f32  = [atom_features | pooling one-hot]
    adj_ref,     # [N, N]   bf16 (row-normalized)
    w_ref,       # [2F+3H, H] bf16 = [wl0; wr0; wl1; wr1; wout]
    vec_ref,     # [8, H]   f32  = [bl0; g0; b0; bl1; bout; gf; bf; 0]
    out_ref,     # [G, out_w] f32 (lane-dense, out_w >= H)
    *,
    f_in,
    num_graphs,
):
    f32 = jnp.float32
    bf16 = jnp.bfloat16
    F = f_in
    G = num_graphs
    H = vec_ref.shape[-1]

    xm = xm_ref[...]                      # [N, F+G] f32
    x = xm[:, :F]                         # [N, F]
    maskt = xm[:, F:F + G]                # [N, G] one-hot
    adj = adj_ref[...]                    # [N, N] bf16

    vecs = vec_ref[...]                   # [8, H] f32
    bl0 = vecs[0:1, :]
    g0 = vecs[1:2, :]
    b0 = vecs[2:3, :]
    bl1 = vecs[3:4, :]
    bout = vecs[4:5, :]
    gf = vecs[5:6, :]
    bf_ = vecs[6:7, :]

    # Static sublane views into the packed weight slab (all offsets %8 == 0).
    wl0 = w_ref[0:F, :]
    wr0 = w_ref[F:2 * F, :]
    wl1 = w_ref[2 * F:2 * F + H, :]
    wr1 = w_ref[2 * F + H:2 * F + 2 * H, :]
    wout = w_ref[2 * F + 2 * H:2 * F + 3 * H, :]

    # ---- SAGE layer 0: neighbor-mean + root, two dots (no lane concat) ----
    xb = x.astype(bf16)
    agg = jnp.dot(adj, xb, preferred_element_type=f32)                     # [N, F]
    h = (jnp.dot(agg.astype(bf16), wl0, preferred_element_type=f32)
         + jnp.dot(xb, wr0, preferred_element_type=f32) + bl0)             # [N, H]
    # norm -> act (act_first=False) -> dropout(identity)
    h = _layernorm(h, g0, b0)
    h = jnp.maximum(h, 0.0)

    # ---- SAGE layer 1 (last layer: conv only) ----
    hb = h.astype(bf16)
    agg = jnp.dot(adj, hb, preferred_element_type=f32)                     # [N, H]
    h = (jnp.dot(agg.astype(bf16), wl1, preferred_element_type=f32)
         + jnp.dot(hb, wr1, preferred_element_type=f32) + bl1)             # [N, H]

    # ---- global_max_pool: one masked select/max, entirely in vregs ----
    neg = jnp.float32(-1e30)
    masked = jnp.where(maskt[:, :, None] > 0.0, h[:, None, :], neg)        # [N, G, H]
    pooled = jnp.max(masked, axis=0)                                       # [G, H]

    # ---- out Linear -> ReLU -> LayerNorm ----
    y = jnp.dot(pooled.astype(bf16), wout, preferred_element_type=f32) + bout
    y = jnp.maximum(y, 0.0)
    y = _layernorm(y, gf, bf_)

    # Lane-dense (unmasked) store: zero-pad the last dim to out_ref width.
    out_w = out_ref.shape[-1]
    if out_w > H:
        y = jnp.concatenate([y, jnp.zeros((G, out_w - H), f32)], axis=-1)
    out_ref[...] = y.astype(out_ref.dtype)


def pack_params(params):
    """One-time packing, hoisted off the forward path."""
    H = params["wl1"].shape[1]
    w_slab = jnp.concatenate(
        [params["wl0"], params["wr0"], params["wl1"], params["wr1"],
         params["wout"]], axis=0).astype(jnp.bfloat16)                     # [2F+3H, H]
    vecs = jnp.concatenate(
        [params["bl0"], params["g0"], params["b0"], params["bl1"],
         params["bout"], params["gf"], params["bf"],
         jnp.zeros((1, H), jnp.float32)], axis=0)                          # [8, H]
    return {"w": w_slab, "vecs": vecs}


def build_graph_inputs(atom_features, edge_index, batch, num_graphs):
    """Dense row-normalized adjacency (bf16) + pooling one-hot folded onto the
    node features ([N, F+G]). Cacheable by the caller when edge_index/batch
    repeat across forward passes."""
    N = atom_features.shape[0]
    src, dst = edge_index[0], edge_index[1]
    # A[dst, src] = 1 ; mean aggregation => divide each row by in-degree.
    adj = jnp.zeros((N, N), jnp.float32).at[dst, src].add(1.0)
    deg = jnp.sum(adj, axis=1, keepdims=True)
    adj = (adj / jnp.maximum(deg, 1.0)).astype(jnp.bfloat16)
    maskt = (batch[:, None] == jnp.arange(num_graphs, dtype=batch.dtype)[None, :]
             ).astype(atom_features.dtype)                                 # [N, G]
    xm = jnp.concatenate([atom_features, maskt], axis=-1)                  # [N, F+G]
    return xm, adj


def drug_embed_apply(xm, adj, w_slab, vecs, *, f_in, hidden, num_graphs):
    """Single fused Pallas call (everything fits in VMEM at these shapes)."""
    G, H = num_graphs, hidden
    out_w = ((H + _LANE - 1) // _LANE) * _LANE                              # lane-dense
    vmem = pl.BlockSpec(memory_space=pltpu.MemorySpace.VMEM)
    kern = functools.partial(drug_embed_kernel, f_in=f_in, num_graphs=G)
    out = pl.pallas_call(
        kern,
        out_shape=jax.ShapeDtypeStruct((G, out_w), jnp.float32),
        in_specs=[vmem, vmem, vmem, vmem],
        out_specs=vmem,
    )(xm, adj, w_slab, vecs)
    return out[:, :H]


def drug_embed_forward(atom_features, edge_index, batch, packed, *,
                       f_in, hidden, num_graphs):
    xm, adj = build_graph_inputs(atom_features, edge_index, batch, num_graphs)
    return drug_embed_apply(xm, adj, packed["w"], packed["vecs"],
                            f_in=f_in, hidden=hidden, num_graphs=num_graphs)


def init_params(key, f_in, hidden):
    ks = jax.random.split(key, 8)
    s0 = 1.0 / np.sqrt(f_in)
    s1 = 1.0 / np.sqrt(hidden)
    return {
        # SAGE layer 0 (in=f_in, out=hidden): lin_r (root, no bias), lin_l (neigh, bias)
        "wr0": jax.random.normal(ks[0], (f_in, hidden), jnp.float32) * s0,
        "wl0": jax.random.normal(ks[1], (f_in, hidden), jnp.float32) * s0,
        "bl0": jnp.zeros((1, hidden), jnp.float32),
        # layer-0 LayerNorm affine
        "g0": jnp.ones((1, hidden), jnp.float32),
        "b0": jnp.zeros((1, hidden), jnp.float32),
        # SAGE layer 1 (in=hidden, out=hidden)
        "wr1": jax.random.normal(ks[2], (hidden, hidden), jnp.float32) * s1,
        "wl1": jax.random.normal(ks[3], (hidden, hidden), jnp.float32) * s1,
        "bl1": jnp.zeros((1, hidden), jnp.float32),
        # out Linear
        "wout": jax.random.normal(ks[4], (hidden, hidden), jnp.float32) * s1,
        "bout": jax.random.normal(ks[5], (1, hidden), jnp.float32) * s1,
        # final LayerNorm affine
        "gf": jnp.ones((1, hidden), jnp.float32),
        "bf": jnp.zeros((1, hidden), jnp.float32),
    }


def reference_forward(atom_features, edge_index, batch, params, num_graphs):
    """Pure-JAX reference. Mirrors the kernel's precision policy (bf16 matmul
    operands, f32 accumulation, two-dot SAGE form, f32 LayerNorm/ReLU)."""
    b16 = lambda a: a.astype(jnp.bfloat16)
    mm = lambda a, b: jnp.dot(b16(a), b16(b), preferred_element_type=jnp.float32)

    N = atom_features.shape[0]
    adj = jnp.zeros((N, N), jnp.float32).at[edge_index[1], edge_index[0]].add(1.0)
    adj = adj / jnp.maximum(jnp.sum(adj, axis=1, keepdims=True), 1.0)

    def ln(h, g, b, eps=1e-5):
        mu = jnp.mean(h, axis=-1, keepdims=True)
        var = jnp.mean((h - mu) ** 2, axis=-1, keepdims=True)
        return (h - mu) * jax.lax.rsqrt(var + eps) * g + b

    x = atom_features
    agg = mm(adj, x)
    h = mm(agg, params["wl0"]) + mm(x, params["wr0"]) + params["bl0"]
    h = jnp.maximum(ln(h, params["g0"], params["b0"]), 0.0)
    agg = mm(adj, h)
    h = mm(agg, params["wl1"]) + mm(h, params["wr1"]) + params["bl1"]

    mask = batch[None, :] == jnp.arange(num_graphs)[:, None]
    pooled = jnp.max(jnp.where(mask[:, :, None], h[None], -1e30), axis=1)
    y = jnp.maximum(mm(pooled, params["wout"]) + params["bout"], 0.0)
    return ln(y, params["gf"], params["bf"])


if __name__ == "__main__":
    key = jax.random.PRNGKey(0)
    N, F_IN, HIDDEN, G, E = 24, 16, 32, 4, 64   # output=32, layers=2, dr unused (eval)

    k_x, k_e, k_p = jax.random.split(key, 3)
    atom_features = jax.random.normal(k_x, (N, F_IN), jnp.float32)
    edge_index = jax.random.randint(k_e, (2, E), 0, N, jnp.int32)
    batch = jnp.repeat(jnp.arange(G, dtype=jnp.int32), N // G)   # 6 nodes per graph

    params = init_params(k_p, F_IN, HIDDEN)
    packed = pack_params(params)   # hoisted: done once, reused every forward

    fwd = jax.jit(functools.partial(
        drug_embed_forward, f_in=F_IN, hidden=HIDDEN, num_graphs=G))
    out = fwd(atom_features, edge_index, batch, packed)
    jax.block_until_ready(out)

    ref = reference_forward(atom_features, edge_index, batch, params, G)
    np.testing.assert_allclose(np.asarray(out), np.asarray(ref), rtol=1e-3, atol=1e-3)

    print("KERNEL_OK")
</pallas_src>

<mosaic_0001>
module attributes {stable_mosaic.version = 11 : i64} {
  func.func private @main(%arg0: i32) attributes {dimension_semantics = [#tpu.dimension_semantics<core_parallel>], iteration_bounds = array<i64: 2>, tpu.core_type = #tpu.core_type<sc_scalar_subcore>, window_params = []} {
    return
  }
}

module attributes {stable_mosaic.version = 11 : i64} {
  func.func private @main(%arg0: i32) attributes {dimension_semantics = [#tpu.dimension_semantics<core_parallel>], iteration_bounds = array<i64: 2>, tpu.core_type = #tpu.core_type<sc_scalar_subcore>, window_params = []} {
    return
  }
}

module attributes {stable_mosaic.version = 11 : i64} {
  func.func @drug_embed_kernel(%arg0: memref<24x20xf32, #tpu.memory_space<vmem>>, %arg1: memref<24x24xbf16, #tpu.memory_space<vmem>>, %arg2: memref<128x32xbf16, #tpu.memory_space<vmem>>, %arg3: memref<8x32xf32, #tpu.memory_space<vmem>>, %arg4: memref<4x128xf32, #tpu.memory_space<vmem>>) attributes {dimension_semantics = [], scalar_prefetch = 0 : i64, scratch_operands = 0 : i64, tpu.core_type = #tpu.core_type<tc>} {
    %c0 = arith.constant 0 : index
    %c0_0 = arith.constant 0 : index
    %0 = vector.load %arg0[%c0, %c0_0] : memref<24x20xf32, #tpu.memory_space<vmem>>, vector<24x20xf32>
    %1 = vector.extract_strided_slice %0 {offsets = [0, 0], sizes = [24, 16], strides = [1, 1]} : vector<24x20xf32> to vector<24x16xf32>
    %2 = vector.extract_strided_slice %0 {offsets = [0, 16], sizes = [24, 4], strides = [1, 1]} : vector<24x20xf32> to vector<24x4xf32>
    %c0_1 = arith.constant 0 : index
    %c0_2 = arith.constant 0 : index
    %3 = vector.load %arg1[%c0_1, %c0_2] : memref<24x24xbf16, #tpu.memory_space<vmem>>, vector<24x24xbf16>
    %c0_3 = arith.constant 0 : index
    %c0_4 = arith.constant 0 : index
    %4 = vector.load %arg3[%c0_3, %c0_4] : memref<8x32xf32, #tpu.memory_space<vmem>>, vector<8x32xf32>
    %5 = vector.extract_strided_slice %4 {offsets = [0, 0], sizes = [1, 32], strides = [1, 1]} : vector<8x32xf32> to vector<1x32xf32>
    %6 = vector.extract_strided_slice %4 {offsets = [1, 0], sizes = [1, 32], strides = [1, 1]} : vector<8x32xf32> to vector<1x32xf32>
    %7 = vector.extract_strided_slice %4 {offsets = [2, 0], sizes = [1, 32], strides = [1, 1]} : vector<8x32xf32> to vector<1x32xf32>
    %8 = vector.extract_strided_slice %4 {offsets = [3, 0], sizes = [1, 32], strides = [1, 1]} : vector<8x32xf32> to vector<1x32xf32>
    %9 = vector.extract_strided_slice %4 {offsets = [4, 0], sizes = [1, 32], strides = [1, 1]} : vector<8x32xf32> to vector<1x32xf32>
    %10 = vector.extract_strided_slice %4 {offsets = [5, 0], sizes = [1, 32], strides = [1, 1]} : vector<8x32xf32> to vector<1x32xf32>
    %11 = vector.extract_strided_slice %4 {offsets = [6, 0], sizes = [1, 32], strides = [1, 1]} : vector<8x32xf32> to vector<1x32xf32>
    %c0_5 = arith.constant 0 : index
    %c0_6 = arith.constant 0 : index
    %12 = vector.load %arg2[%c0_5, %c0_6] : memref<128x32xbf16, #tpu.memory_space<vmem>>, vector<16x32xbf16>
    %c16 = arith.constant 16 : index
    %c0_7 = arith.constant 0 : index
    %13 = vector.load %arg2[%c16, %c0_7] : memref<128x32xbf16, #tpu.memory_space<vmem>>, vector<16x32xbf16>
    %c32 = arith.constant 32 : index
    %c0_8 = arith.constant 0 : index
    %14 = vector.load %arg2[%c32, %c0_8] : memref<128x32xbf16, #tpu.memory_space<vmem>>, vector<32x32xbf16>
    %c64 = arith.constant 64 : index
    %c0_9 = arith.constant 0 : index
    %15 = vector.load %arg2[%c64, %c0_9] : memref<128x32xbf16, #tpu.memory_space<vmem>>, vector<32x32xbf16>
    %c96 = arith.constant 96 : index
    %c0_10 = arith.constant 0 : index
    %16 = vector.load %arg2[%c96, %c0_10] : memref<128x32xbf16, #tpu.memory_space<vmem>>, vector<32x32xbf16>
    %17 = arith.truncf %1 : vector<24x16xf32> to vector<24x16xbf16>
    %cst = arith.constant dense<0.000000e+00> : vector<24x16xf32>
    %18 = tpu.matmul %3, %17, %cst {dimension_numbers = #tpu.dot_dimension_numbers<[1], [0], [0], [1], [0, 0, 1, 1], [], []>} : vector<24x24xbf16>, vector<24x16xbf16>, vector<24x16xf32> -> vector<24x16xf32>
    %19 = arith.truncf %18 : vector<24x16xf32> to vector<24x16xbf16>
    %cst_11 = arith.constant dense<0.000000e+00> : vector<24x32xf32>
    %20 = tpu.matmul %19, %12, %cst_11 {dimension_numbers = #tpu.dot_dimension_numbers<[1], [0], [0], [1], [0, 0, 1, 1], [], []>} : vector<24x16xbf16>, vector<16x32xbf16>, vector<24x32xf32> -> vector<24x32xf32>
    %cst_12 = arith.constant dense<0.000000e+00> : vector<24x32xf32>
    %21 = tpu.matmul %17, %13, %cst_12 {dimension_numbers = #tpu.dot_dimension_numbers<[1], [0], [0], [1], [0, 0, 1, 1], [], []>} : vector<24x16xbf16>, vector<16x32xbf16>, vector<24x32xf32> -> vector<24x32xf32>
    %22 = arith.addf %20, %21 : vector<24x32xf32>
    %23 = vector.broadcast %5 : vector<1x32xf32> to vector<24x32xf32>
    %24 = arith.addf %22, %23 : vector<24x32xf32>
    %cst_13 = arith.constant dense<0.000000e+00> : vector<24xf32>
    %25 = vector.multi_reduction <add>, %24, %cst_13 [1] : vector<24x32xf32> to vector<24xf32>
    %26 = vector.shape_cast %25 : vector<24xf32> to vector<24x1xf32>
    %cst_14 = arith.constant 3.200000e+01 : f32
    %27 = vector.broadcast %cst_14 : f32 to vector<24x1xf32>
    %28 = arith.divf %26, %27 : vector<24x1xf32>
    %29 = vector.broadcast %28 : vector<24x1xf32> to vector<24x32xf32>
    %30 = arith.subf %24, %29 : vector<24x32xf32>
    %31 = vector.broadcast %28 : vector<24x1xf32> to vector<24x32xf32>
    %32 = arith.subf %24, %31 : vector<24x32xf32>
    %33 = arith.mulf %30, %32 : vector<24x32xf32>
    %cst_15 = arith.constant dense<0.000000e+00> : vector<24xf32>
    %34 = vector.multi_reduction <add>, %33, %cst_15 [1] : vector<24x32xf32> to vector<24xf32>
    %35 = vector.shape_cast %34 : vector<24xf32> to vector<24x1xf32>
    %cst_16 = arith.constant 3.200000e+01 : f32
    %36 = vector.broadcast %cst_16 : f32 to vector<24x1xf32>
    %37 = arith.divf %35, %36 : vector<24x1xf32>
    %38 = vector.broadcast %28 : vector<24x1xf32> to vector<24x32xf32>
    %39 = arith.subf %24, %38 : vector<24x32xf32>
    %cst_17 = arith.constant 9.99999974E-6 : f32
    %40 = vector.broadcast %cst_17 : f32 to vector<24x1xf32>
    %41 = arith.addf %37, %40 : vector<24x1xf32>
    %42 = math.rsqrt %41 : vector<24x1xf32>
    %43 = vector.broadcast %42 : vector<24x1xf32> to vector<24x32xf32>
    %44 = arith.mulf %39, %43 : vector<24x32xf32>
    %45 = vector.broadcast %6 : vector<1x32xf32> to vector<24x32xf32>
    %46 = arith.mulf %44, %45 : vector<24x32xf32>
    %47 = vector.broadcast %7 : vector<1x32xf32> to vector<24x32xf32>
    %48 = arith.addf %46, %47 : vector<24x32xf32>
    %cst_18 = arith.constant 0.000000e+00 : f32
    %49 = vector.broadcast %cst_18 : f32 to vector<24x32xf32>
    %50 = arith.maximumf %48, %49 : vector<24x32xf32>
    %51 = arith.truncf %50 : vector<24x32xf32> to vector<24x32xbf16>
    %cst_19 = arith.constant dense<0.000000e+00> : vector<24x32xf32>
    %52 = tpu.matmul %3, %51, %cst_19 {dimension_numbers = #tpu.dot_dimension_numbers<[1], [0], [0], [1], [0, 0, 1, 1], [], []>} : vector<24x24xbf16>, vector<24x32xbf16>, vector<24x32xf32> -> vector<24x32xf32>
    %53 = arith.truncf %52 : vector<24x32xf32> to vector<24x32xbf16>
    %cst_20 = arith.constant dense<0.000000e+00> : vector<24x32xf32>
    %54 = tpu.matmul %53, %14, %cst_20 {dimension_numbers = #tpu.dot_dimension_numbers<[1], [0], [0], [1], [0, 0, 1, 1], [], []>} : vector<24x32xbf16>, vector<32x32xbf16>, vector<24x32xf32> -> vector<24x32xf32>
    %cst_21 = arith.constant dense<0.000000e+00> : vector<24x32xf32>
    %55 = tpu.matmul %51, %15, %cst_21 {dimension_numbers = #tpu.dot_dimension_numbers<[1], [0], [0], [1], [0, 0, 1, 1], [], []>} : vector<24x32xbf16>, vector<32x32xbf16>, vector<24x32xf32> -> vector<24x32xf32>
    %56 = arith.addf %54, %55 : vector<24x32xf32>
    %57 = vector.broadcast %8 : vector<1x32xf32> to vector<24x32xf32>
    %58 = arith.addf %56, %57 : vector<24x32xf32>
    %59 = vector.shape_cast %2 : vector<24x4xf32> to vector<24x4x1xf32>
    %cst_22 = arith.constant 0.000000e+00 : f32
    %60 = vector.broadcast %cst_22 : f32 to vector<24x4x1xf32>
    %61 = arith.cmpf ogt, %59, %60 : vector<24x4x1xf32>
    %62 = vector.shape_cast %58 : vector<24x32xf32> to vector<24x1x32xf32>
    %cst_23 = arith.constant -1.000000e+30 : f32
    %63 = vector.shape_cast %61 : vector<24x4x1xi1> to vector<24x4x1xi1>
    %64 = vector.broadcast %63 : vector<24x4x1xi1> to vector<24x4x32xi1>
    %65 = vector.shape_cast %62 : vector<24x1x32xf32> to vector<24x1x32xf32>
    %66 = vector.broadcast %65 : vector<24x1x32xf32> to vector<24x4x32xf32>
    %67 = vector.broadcast %cst_23 : f32 to vector<24x4x32xf32>
    %68 = arith.select %64, %66, %67 : vector<24x4x32xi1>, vector<24x4x32xf32>
    %cst_24 = arith.constant dense<0xFF800000> : vector<4x32xf32>
    %69 = vector.multi_reduction <maximumf>, %68, %cst_24 [0] : vector<24x4x32xf32> to vector<4x32xf32>
    %70 = arith.truncf %69 : vector<4x32xf32> to vector<4x32xbf16>
    %cst_25 = arith.constant dense<0.000000e+00> : vector<4x32xf32>
    %71 = tpu.matmul %70, %16, %cst_25 {dimension_numbers = #tpu.dot_dimension_numbers<[1], [0], [0], [1], [0, 0, 1, 1], [], []>} : vector<4x32xbf16>, vector<32x32xbf16>, vector<4x32xf32> -> vector<4x32xf32>
    %72 = vector.broadcast %9 : vector<1x32xf32> to vector<4x32xf32>
    %73 = arith.addf %71, %72 : vector<4x32xf32>
    %cst_26 = arith.constant 0.000000e+00 : f32
    %74 = vector.broadcast %cst_26 : f32 to vector<4x32xf32>
    %75 = arith.maximumf %73, %74 : vector<4x32xf32>
    %cst_27 = arith.constant dense<0.000000e+00> : vector<4xf32>
    %76 = vector.multi_reduction <add>, %75, %cst_27 [1] : vector<4x32xf32> to vector<4xf32>
    %77 = vector.shape_cast %76 : vector<4xf32> to vector<4x1xf32>
    %cst_28 = arith.constant 3.200000e+01 : f32
    %78 = vector.broadcast %cst_28 : f32 to vector<4x1xf32>
    %79 = arith.divf %77, %78 : vector<4x1xf32>
    %80 = vector.broadcast %79 : vector<4x1xf32> to vector<4x32xf32>
    %81 = arith.subf %75, %80 : vector<4x32xf32>
    %82 = vector.broadcast %79 : vector<4x1xf32> to vector<4x32xf32>
    %83 = arith.subf %75, %82 : vector<4x32xf32>
    %84 = arith.mulf %81, %83 : vector<4x32xf32>
    %cst_29 = arith.constant dense<0.000000e+00> : vector<4xf32>
    %85 = vector.multi_reduction <add>, %84, %cst_29 [1] : vector<4x32xf32> to vector<4xf32>
    %86 = vector.shape_cast %85 : vector<4xf32> to vector<4x1xf32>
    %cst_30 = arith.constant 3.200000e+01 : f32
    %87 = vector.broadcast %cst_30 : f32 to vector<4x1xf32>
    %88 = arith.divf %86, %87 : vector<4x1xf32>
    %89 = vector.broadcast %79 : vector<4x1xf32> to vector<4x32xf32>
    %90 = arith.subf %75, %89 : vector<4x32xf32>
    %cst_31 = arith.constant 9.99999974E-6 : f32
    %91 = vector.broadcast %cst_31 : f32 to vector<4x1xf32>
    %92 = arith.addf %88, %91 : vector<4x1xf32>
    %93 = math.rsqrt %92 : vector<4x1xf32>
    %94 = vector.broadcast %93 : vector<4x1xf32> to vector<4x32xf32>
    %95 = arith.mulf %90, %94 : vector<4x32xf32>
    %96 = vector.broadcast %10 : vector<1x32xf32> to vector<4x32xf32>
    %97 = arith.mulf %95, %96 : vector<4x32xf32>
    %98 = vector.broadcast %11 : vector<1x32xf32> to vector<4x32xf32>
    %99 = arith.addf %97, %98 : vector<4x32xf32>
    %cst_32 = arith.constant 0.000000e+00 : f32
    %100 = vector.broadcast %cst_32 : f32 to vector<4x96xf32>
    %101 = tpu.concatenate %99, %100 in 1 : vector<4x32xf32>, vector<4x96xf32> -> vector<4x128xf32>
    %c0_33 = arith.constant 0 : index
    %c0_34 = arith.constant 0 : index
    %102 = vector.load %arg4[%c0_33, %c0_34] : memref<4x128xf32, #tpu.memory_space<vmem>>, vector<4x128xf32>
    tpu.vector_store %arg4[%c0_33, %c0_34], %101 {strides = array<i32>} : memref<4x128xf32, #tpu.memory_space<vmem>>, vector<4x128xf32>,
    return
  }
}

</mosaic_0001>

<llo_original>
// kernel: drug_embed_forward.1
$region0: #{drug_embed_forward.1}
  #allocation0 [shape = 'u32[]', space=smem, size = 0x4, offset = 0x4, fixed_abs, tag = 'smem constant byte address 0x4 - core index']
  #allocation1 [shape = 'u32[144,128]{1,0:T(1,128)}', space=vmem, size = 0x12000, scoped, tag = 'internal scratch']
  %s0 = inlined_call_operand.vmem [shape: f32[24,20], index: 0, kind: input, shape index: {}]
  %s1 = inlined_call_operand.vmem [shape: bf16[24,24], index: 1, kind: input, shape index: {}]
  %s2 = inlined_call_operand.vmem [shape: bf16[128,32], index: 2, kind: input, shape index: {}]
  %s3 = inlined_call_operand.vmem [shape: f32[8,32], index: 3, kind: input, shape index: {}]
  %s4 = inlined_call_operand.hbm [shape: f32[4,128], index: 4, kind: output, shape index: {}]
  %s5 = sld [smem:[#allocation0]]
  $region26: #{drug_embed_forward.1} parent=0
    _
  %s7 = ssub.s32 1, %s5
  %s8 = scalar_select 0, %s7, %s5
  $region1: #{drug_embed_forward.1} parent=0
    #allocation2 [shape = 'u8[2048]{0}', space=vmem, size = 0x800, scoped, tag = 'output window, operand 0, single buffered']
    #allocation3 [shape = 's32[1]{0}', space=sflag, size = 0x4, scoped, tag = 'scoped memory for drug_embed_forward.1']
    %9 = vsyncpa [#allocation3], 0
    // Predicated region
    $region2: #{drug_embed_forward.1} parent=1 // pred_check
      _
    $region3: #{drug_embed_forward.1} parent=1 // pred_check_branch
      %11 = sbr.rel (0) target = $region5
    $region4: #{drug_embed_forward.1} parent=1 // pred_region
      _
    $region5: #{drug_embed_forward.1} parent=1 // pred_fallthru
      _
    // Predicated region
    $region6: #{drug_embed_forward.1} parent=1 // pred_check
      _
    $region7: #{drug_embed_forward.1} parent=1 // pred_check_branch
      %13 = sbr.rel (0) target = $region9
    $region8: #{drug_embed_forward.1} parent=1 // pred_region
      _
    $region9: #{drug_embed_forward.1} parent=1 // pred_fallthru
      _
    // Predicated region
    $region10: #{drug_embed_forward.1} parent=1 // pred_check
      _
    $region11: #{drug_embed_forward.1} parent=1 // pred_check_branch
      %15 = sbr.rel (0) target = $region13
    $region12: #{drug_embed_forward.1} parent=1 // pred_region
      _
    $region13: #{drug_embed_forward.1} parent=1 // pred_fallthru
      _
    // Predicated region
    $region14: #{drug_embed_forward.1} parent=1 // pred_check
      _
    $region15: #{drug_embed_forward.1} parent=1 // pred_check_branch
      %17 = sbr.rel (0) target = $region17
    $region16: #{drug_embed_forward.1} parent=1 // pred_region
      _
    $region17: #{drug_embed_forward.1} parent=1 // pred_fallthru
      _
    %v19 = vld [vmem:[%s0] sm:$0xff]
    %v20 = vld [vmem:[%s0 + $0x8] sm:$0xff]
    %v21 = vld [vmem:[%s0 + $0x10] sm:$0xff]
    %v22 = vld [vmem:[%s1] sm:$0xf]
    %v23 = vld [vmem:[%s1 + $0x4] sm:$0xf]
    %v24 = vld [vmem:[%s1 + $0x8] sm:$0xf]
    %v25 = vld [vmem:[%s3] sm:$0xff]
    %v26 = vld [vmem:[%s2] sm:$0xf]
    %v27 = vld [vmem:[%s2 + $0x4] sm:$0xf]
    %v28 = vld [vmem:[%s2 + $0x8] sm:$0xf]
    %v29 = vld [vmem:[%s2 + $0xc] sm:$0xf]
    %v30 = vld [vmem:[%s2 + $0x10] sm:$0xf]
    %v31 = vld [vmem:[%s2 + $0x14] sm:$0xf]
    %v32 = vld [vmem:[%s2 + $0x18] sm:$0xf]
    %v33 = vld [vmem:[%s2 + $0x1c] sm:$0xf]
    %v34 = vld [vmem:[%s2 + $0x20] sm:$0xf]
    %v35 = vld [vmem:[%s2 + $0x24] sm:$0xf]
    %v36 = vld [vmem:[%s2 + $0x28] sm:$0xf]
    %v37 = vld [vmem:[%s2 + $0x2c] sm:$0xf]
    %v38 = vld [vmem:[%s2 + $0x30] sm:$0xf]
    %v39 = vld [vmem:[%s2 + $0x34] sm:$0xf]
    %v40 = vld [vmem:[%s2 + $0x38] sm:$0xf]
    %v41 = vld [vmem:[%s2 + $0x3c] sm:$0xf]
    %v42 = vpack.c.bf16 %v20, %v19
    %v43 = vpack.c.bf16 %v21, %v21
    %v47 = vunpack.c.l.b16 %v22
    %v48 = vunpack.c.l.b16 %v23
    %v49 = vunpack.c.l.b16 %v24
    %v50 = vpack.c.b16 %v48, %v47
    %v51 = vpack.c.b16 %v49, %v49
    %vm52 = vcmask 195584
    %v54 = vsel %vm52, %v50, 0
    %v57 = vsel %vm52, %v51, 0
    %vm59 = vcmask 1043456
    %v61 = vsel %vm59, %v43, 0
    %63 = vmatprep.subr.bf16.mxu0 0
    %64 = vmatpush1.bf16.msra.mxu0 %v42
    %65 = vmatprep.subr.bf16.mxu0 0
    %66 = vmatpush1.bf16.msra.mxu0 %v61
    %67 = vmatprep.subr.bf16.mxu0 0
    %68 = vmatpush1.bf16.msra.mxu0 0
    %69 = vmatprep.subr.bf16.mxu0 0
    %70 = vmatpush1.bf16.msra.mxu0 0
    %71 = vmatprep.subr.bf16.mxu0 0
    %72 = vmatpush1.bf16.msra.mxu0 0
    %73 = vmatprep.subr.bf16.mxu0 0
    %74 = vmatpush1.bf16.msra.mxu0 0
    %75 = vmatprep.subr.bf16.mxu0 0
    %76 = vmatpush1.bf16.msra.mxu0 0
    %77 = vmatprep.subr.bf16.mxu0 0
    %78 = vmatpush1.bf16.msra.mxu0 0
    %79 = vmatprep.subr.bf16.mxu0 0
    %80 = vmatpush1.bf16.msra.mxu0 0
    %81 = vmatprep.subr.bf16.mxu0 0
    %82 = vmatpush1.bf16.msra.mxu0 0
    %83 = vmatprep.subr.bf16.mxu0 0
    %84 = vmatpush1.bf16.msra.mxu0 0
    %85 = vmatprep.subr.bf16.mxu0 0
    %86 = vmatpush1.bf16.msra.mxu0 0
    %87 = vmatprep.subr.bf16.mxu0 0
    %88 = vmatpush1.bf16.msra.mxu0 0
    %89 = vmatprep.subr.bf16.mxu0 0
    %90 = vmatpush1.bf16.msra.mxu0 0
    %91 = vmatprep.subr.bf16.mxu0 0
    %92 = vmatpush1.bf16.msra.mxu0 0
    %93 = vmatprep.subr.bf16.mxu0 0
    %94 = vmatpush1.bf16.msra.mxu0 0
    %95 = vmatprep.mubr.bf16.mxu0 0
    %96 = vmatmul.mubr.bf16.gmra.mrb[0].mxu0 %v54
    %v97 = vpop.f32.mrb[0].mxu0
    %v98 = vadd.f32 0.0, %v97
    %v99 = vpop.f32.mrb[0].mxu0
    %v100 = vpop.f32.mrb[0].mxu0
    %v101 = vadd.f32 0.0, %v100
    %v102 = vpop.f32.mrb[0].mxu0
    %103 = vmatprep.mubr.bf16.mxu0 0
    %104 = vmatmul.mubr.bf16.gmra.mrb[0].mxu0 %v57
    %v105 = vpop.f32.mrb[0].mxu0
    %v106 = vadd.f32 0.0, %v105
    %v107 = vpop.f32.mrb[0].mxu0
    %v108 = vpop.f32.mrb[0].mxu0
    %v109 = vpop.f32.mrb[0].mxu0
    %110 = vdwg.mxu0
    %v111 = vpack.c.bf16 %v101, %v98
    %v112 = vpack.c.bf16 %v106, %v106
    %v115 = vunpack.c.l.b16 %v28
    %v116 = vunpack.c.l.b16 %v29
    %v117 = vpack.c.b16 %v116, %v115
    %vm119 = vcmask 130048
    %v121 = vsel %vm119, %v42, 0
    %v123 = vsel %vm119, %v43, 0
    %125 = vmatprep.subr.bf16.mxu0 0
    %126 = vmatpush1.bf16.msra.mxu0 %v117
    %127 = vmatprep.subr.bf16.mxu0 0
    %128 = vmatpush1.bf16.msra.mxu0 0
    %129 = vmatprep.subr.bf16.mxu0 0
    %130 = vmatpush1.bf16.msra.mxu0 0
    %131 = vmatprep.subr.bf16.mxu0 0
    %132 = vmatpush1.bf16.msra.mxu0 0
    %133 = vmatprep.subr.bf16.mxu0 0
    %134 = vmatpush1.bf16.msra.mxu0 0
    %135 = vmatprep.subr.bf16.mxu0 0
    %136 = vmatpush1.bf16.msra.mxu0 0
    %137 = vmatprep.subr.bf16.mxu0 0
    %138 = vmatpush1.bf16.msra.mxu0 0
    %139 = vmatprep.subr.bf16.mxu0 0
    %140 = vmatpush1.bf16.msra.mxu0 0
    %141 = vmatprep.subr.bf16.mxu0 0
    %142 = vmatpush1.bf16.msra.mxu0 0
    %143 = vmatprep.subr.bf16.mxu0 0
    %144 = vmatpush1.bf16.msra.mxu0 0
    %145 = vmatprep.subr.bf16.mxu0 0
    %146 = vmatpush1.bf16.msra.mxu0 0
    %147 = vmatprep.subr.bf16.mxu0 0
    %148 = vmatpush1.bf16.msra.mxu0 0
    %149 = vmatprep.subr.bf16.mxu0 0
    %150 = vmatpush1.bf16.msra.mxu0 0
    %151 = vmatprep.subr.bf16.mxu0 0
    %152 = vmatpush1.bf16.msra.mxu0 0
    %153 = vmatprep.subr.bf16.mxu0 0
    %154 = vmatpush1.bf16.msra.mxu0 0
    %155 = vmatprep.subr.bf16.mxu0 0
    %156 = vmatpush1.bf16.msra.mxu0 0
    %157 = vmatprep.mubr.bf16.mxu0 0
    %158 = vmatmul.mubr.bf16.gmra.mrb[0].mxu0 %v121
    %v159 = vpop.f32.mrb[0].mxu0
    %v160 = vadd.f32 0.0, %v159
    %v161 = vpop.f32.mrb[0].mxu0
    %v162 = vpop.f32.mrb[0].mxu0
    %v163 = vadd.f32 0.0, %v162
    %v164 = vpop.f32.mrb[0].mxu0
    %165 = vmatprep.mubr.bf16.mxu0 0
    %166 = vmatmul.mubr.bf16.gmra.mrb[0].mxu0 %v123
    %v167 = vpop.f32.mrb[0].mxu0
    %v168 = vadd.f32 0.0, %v167
    %v169 = vpop.f32.mrb[0].mxu0
    %v170 = vpop.f32.mrb[0].mxu0
    %v171 = vpop.f32.mrb[0].mxu0
    %172 = vdwg.mxu0
    %v175 = vunpack.c.l.b16 %v26
    %v176 = vunpack.c.l.b16 %v27
    %v177 = vpack.c.b16 %v176, %v175
    %v180 = vsel %vm119, %v111, 0
    %v183 = vsel %vm119, %v112, 0
    %185 = vmatprep.subr.bf16.mxu0 0
    %186 = vmatpush1.bf16.msra.mxu0 %v177
    %187 = vmatprep.subr.bf16.mxu0 0
    %188 = vmatpush1.bf16.msra.mxu0 0
    %189 = vmatprep.subr.bf16.mxu0 0
    %190 = vmatpush1.bf16.msra.mxu0 0
    %191 = vmatprep.subr.bf16.mxu0 0
    %192 = vmatpush1.bf16.msra.mxu0 0
    %193 = vmatprep.subr.bf16.mxu0 0
    %194 = vmatpush1.bf16.msra.mxu0 0
    %195 = vmatprep.subr.bf16.mxu0 0
    %196 = vmatpush1.bf16.msra.mxu0 0
    %197 = vmatprep.subr.bf16.mxu0 0
    %198 = vmatpush1.bf16.msra.mxu0 0
    %199 = vmatprep.subr.bf16.mxu0 0
    %200 = vmatpush1.bf16.msra.mxu0 0
    %201 = vmatprep.subr.bf16.mxu0 0
    %202 = vmatpush1.bf16.msra.mxu0 0
    %203 = vmatprep.subr.bf16.mxu0 0
    %204 = vmatpush1.bf16.msra.mxu0 0
    %205 = vmatprep.subr.bf16.mxu0 0
    %206 = vmatpush1.bf16.msra.mxu0 0
    %207 = vmatprep.subr.bf16.mxu0 0
    %208 = vmatpush1.bf16.msra.mxu0 0
    %209 = vmatprep.subr.bf16.mxu0 0
    %210 = vmatpush1.bf16.msra.mxu0 0
    %211 = vmatprep.subr.bf16.mxu0 0
    %212 = vmatpush1.bf16.msra.mxu0 0
    %213 = vmatprep.subr.bf16.mxu0 0
    %214 = vmatpush1.bf16.msra.mxu0 0
    %215 = vmatprep.subr.bf16.mxu0 0
    %216 = vmatpush1.bf16.msra.mxu0 0
    %217 = vmatprep.mubr.bf16.mxu0 0
    %218 = vmatmul.mubr.bf16.gmra.mrb[0].mxu0 %v180
    %v219 = vpop.f32.mrb[0].mxu0
    %v220 = vadd.f32 %v160, %v219
    %v221 = vpop.f32.mrb[0].mxu0
    %v222 = vpop.f32.mrb[0].mxu0
    %v223 = vadd.f32 %v163, %v222
    %v224 = vpop.f32.mrb[0].mxu0
    %225 = vmatprep.mubr.bf16.mxu0 0
    %226 = vmatmul.mubr.bf16.gmra.mrb[0].mxu0 %v183
    %v227 = vpop.f32.mrb[0].mxu0
    %v228 = vadd.f32 %v168, %v227
    %v229 = vpop.f32.mrb[0].mxu0
    %v230 = vpop.f32.mrb[0].mxu0
    %v231 = vpop.f32.mrb[0].mxu0
    %232 = vdwg.mxu0
    %v233 = vlaneseq
    %v234 = vshrl.u32 %v233, 7
    %v235 = vsub.s32 0, %v234
    %v236 = vrot.slane %v25, %v235
    %v237 = vadd.f32 %v220, %v236
    %v238 = vadd.f32 %v223, %v236
    %v239 = vadd.f32 %v228, %v236
    %vm240 = vcmask 261120
    %v241 = vsel %vm240, %v237, 0.0
    %242 = vadd.xlane.f32.xlu0 %v241
    %v243 = vpop.xlane.xlu0 %242
    %v244 = vsel %vm240, %v238, 0.0
    %245 = vadd.xlane.f32.xlu0 %v244
    %v246 = vpop.xlane.xlu0 %245
    %v247 = vsel %vm240, %v239, 0.0
    %248 = vadd.xlane.f32.xlu0 %v247
    %v249 = vpop.xlane.xlu0 %248
    %v250 = vrcp.pop 32.0
    %v251 = vmul.f32 %v243, %v250
    %v252 = vmul.f32 %v246, %v250
    %v253 = vmul.f32 %v249, %v250
    %v254 = vsub.f32 %v237, %v251
    %v255 = vsub.f32 %v238, %v252
    %v256 = vsub.f32 %v239, %v253
    %v257 = vmul.f32 %v254, %v254
    %v258 = vmul.f32 %v255, %v255
    %v259 = vmul.f32 %v256, %v256
    %v260 = vsel %vm240, %v257, 0.0
    %261 = vadd.xlane.f32.xlu0 %v260
    %v262 = vpop.xlane.xlu0 %261
    %v263 = vsel %vm240, %v258, 0.0
    %264 = vadd.xlane.f32.xlu0 %v263
    %v265 = vpop.xlane.xlu0 %264
    %v266 = vsel %vm240, %v259, 0.0
    %267 = vadd.xlane.f32.xlu0 %v266
    %v268 = vpop.xlane.xlu0 %267
    %v269 = vmul.f32 %v262, %v250
    %v270 = vmul.f32 %v265, %v250
    %v271 = vmul.f32 %v268, %v250
    %v272 = vadd.f32 %v269, 1e-05
    %v273 = vadd.f32 %v270, 1e-05
    %v274 = vadd.f32 %v271, 1e-05
    %v275 = vrsqrt.pop %v272
    %v276 = vrsqrt.pop %v273
    %v277 = vrsqrt.pop %v274
    %v278 = vmul.f32 %v254, %v275
    %v279 = vmul.f32 %v255, %v276
    %v280 = vmul.f32 %v256, %v277
    %v281 = vlaneseq
    %v282 = vshrl.u32 %v281, 7
    %v283 = vsub.s32 1, %v282
    %v284 = vrot.slane %v25, %v283
    %v285 = vmul.f32 %v278, %v284
    %v286 = vmul.f32 %v279, %v284
    %v287 = vmul.f32 %v280, %v284
    %v288 = vlaneseq
    %v289 = vshrl.u32 %v288, 7
    %v290 = vsub.s32 2, %v289
    %v291 = vrot.slane %v25, %v290
    %v292 = vadd.f32 %v285, %v291
    %v293 = vadd.f32 %v286, %v291
    %v294 = vadd.f32 %v287, %v291
    %v295 = vmax.f32 %v292, 0.0
    %v296 = vmax.f32 %v293, 0.0
    %v297 = vmax.f32 %v294, 0.0
    %v298 = vpack.c.bf16 %v296, %v295
    %v299 = vpack.c.bf16 %v297, %v297
    %v301 = vsel %vm59, %v299, 0
    %303 = vmatprep.subr.bf16.mxu0 0
    %304 = vmatpush1.bf16.msra.mxu0 %v298
    %305 = vmatprep.subr.bf16.mxu0 0
    %306 = vmatpush1.bf16.msra.mxu0 %v301
    %307 = vmatprep.subr.bf16.mxu0 0
    %308 = vmatpush1.bf16.msra.mxu0 0
    %309 = vmatprep.subr.bf16.mxu0 0
    %310 = vmatpush1.bf16.msra.mxu0 0
    %311 = vmatprep.subr.bf16.mxu0 0
    %312 = vmatpush1.bf16.msra.mxu0 0
    %313 = vmatprep.subr.bf16.mxu0 0
    %314 = vmatpush1.bf16.msra.mxu0 0
    %315 = vmatprep.subr.bf16.mxu0 0
    %316 = vmatpush1.bf16.msra.mxu0 0
    %317 = vmatprep.subr.bf16.mxu0 0
    %318 = vmatpush1.bf16.msra.mxu0 0
    %319 = vmatprep.subr.bf16.mxu0 0
    %320 = vmatpush1.bf16.msra.mxu0 0
    %321 = vmatprep.subr.bf16.mxu0 0
    %322 = vmatpush1.bf16.msra.mxu0 0
    %323 = vmatprep.subr.bf16.mxu0 0
    %324 = vmatpush1.bf16.msra.mxu0 0
    %325 = vmatprep.subr.bf16.mxu0 0
    %326 = vmatpush1.bf16.msra.mxu0 0
    %327 = vmatprep.subr.bf16.mxu0 0
    %328 = vmatpush1.bf16.msra.mxu0 0
    %329 = vmatprep.subr.bf16.mxu0 0
    %330 = vmatpush1.bf16.msra.mxu0 0
    %331 = vmatprep.subr.bf16.mxu0 0
    %332 = vmatpush1.bf16.msra.mxu0 0
    %333 = vmatprep.subr.bf16.mxu0 0
    %334 = vmatpush1.bf16.msra.mxu0 0
    %335 = vmatprep.mubr.bf16.mxu0 0
    %336 = vmatmul.mubr.bf16.gmra.mrb[0].mxu0 %v54
    %v337 = vpop.f32.mrb[0].mxu0
    %v338 = vadd.f32 0.0, %v337
    %v339 = vpop.f32.mrb[0].mxu0
    %v340 = vpop.f32.mrb[0].mxu0
    %v341 = vadd.f32 0.0, %v340
    %v342 = vpop.f32.mrb[0].mxu0
    %343 = vmatprep.mubr.bf16.mxu0 0
    %344 = vmatmul.mubr.bf16.gmra.mrb[0].mxu0 %v57
    %v345 = vpop.f32.mrb[0].mxu0
    %v346 = vadd.f32 0.0, %v345
    %v347 = vpop.f32.mrb[0].mxu0
    %v348 = vpop.f32.mrb[0].mxu0
    %v349 = vpop.f32.mrb[0].mxu0
    %350 = vdwg.mxu0
    %v351 = vpack.c.bf16 %v341, %v338
    %v352 = vpack.c.bf16 %v346, %v346
    %v357 = vunpack.c.l.b16 %v34
    %v358 = vunpack.c.l.b16 %v35
    %v359 = vunpack.c.l.b16 %v36
    %v360 = vunpack.c.l.b16 %v37
    %v361 = vpack.c.b16 %v358, %v357
    %v362 = vpack.c.b16 %v360, %v359
    %v366 = vsel %vm240, %v298, 0
    %v368 = vsel %vm240, %v299, 0
    %370 = vmatprep.subr.bf16.mxu0 0
    %371 = vmatpush1.bf16.msra.mxu0 %v361
    %372 = vmatprep.subr.bf16.mxu0 0
    %373 = vmatpush1.bf16.msra.mxu0 %v362
    %374 = vmatprep.subr.bf16.mxu0 0
    %375 = vmatpush1.bf16.msra.mxu0 0
    %376 = vmatprep.subr.bf16.mxu0 0
    %377 = vmatpush1.bf16.msra.mxu0 0
    %378 = vmatprep.subr.bf16.mxu0 0
    %379 = vmatpush1.bf16.msra.mxu0 0
    %380 = vmatprep.subr.bf16.mxu0 0
    %381 = vmatpush1.bf16.msra.mxu0 0
    %382 = vmatprep.subr.bf16.mxu0 0
    %383 = vmatpush1.bf16.msra.mxu0 0
    %384 = vmatprep.subr.bf16.mxu0 0
    %385 = vmatpush1.bf16.msra.mxu0 0
    %386 = vmatprep.subr.bf16.mxu0 0
    %387 = vmatpush1.bf16.msra.mxu0 0
    %388 = vmatprep.subr.bf16.mxu0 0
    %389 = vmatpush1.bf16.msra.mxu0 0
    %390 = vmatprep.subr.bf16.mxu0 0
    %391 = vmatpush1.bf16.msra.mxu0 0
    %392 = vmatprep.subr.bf16.mxu0 0
    %393 = vmatpush1.bf16.msra.mxu0 0
    %394 = vmatprep.subr.bf16.mxu0 0
    %395 = vmatpush1.bf16.msra.mxu0 0
    %396 = vmatprep.subr.bf16.mxu0 0
    %397 = vmatpush1.bf16.msra.mxu0 0
    %398 = vmatprep.subr.bf16.mxu0 0
    %399 = vmatpush1.bf16.msra.mxu0 0
    %400 = vmatprep.subr.bf16.mxu0 0
    %401 = vmatpush1.bf16.msra.mxu0 0
    %402 = vmatprep.mubr.bf16.mxu0 0
    %403 = vmatmul.mubr.bf16.gmra.mrb[0].mxu0 %v366
    %v404 = vpop.f32.mrb[0].mxu0
    %v405 = vadd.f32 0.0, %v404
    %v406 = vpop.f32.mrb[0].mxu0
    %v407 = vpop.f32.mrb[0].mxu0
    %v408 = vadd.f32 0.0, %v407
    %v409 = vpop.f32.mrb[0].mxu0
    %410 = vmatprep.mubr.bf16.mxu0 0
    %411 = vmatmul.mubr.bf16.gmra.mrb[0].mxu0 %v368
    %v412 = vpop.f32.mrb[0].mxu0
    %v413 = vadd.f32 0.0, %v412
    %v414 = vpop.f32.mrb[0].mxu0
    %v415 = vpop.f32.mrb[0].mxu0
    %v416 = vpop.f32.mrb[0].mxu0
    %417 = vdwg.mxu0
    %v422 = vunpack.c.l.b16 %v30
    %v423 = vunpack.c.l.b16 %v31
    %v424 = vunpack.c.l.b16 %v32
    %v425 = vunpack.c.l.b16 %v33
    %v426 = vpack.c.b16 %v423, %v422
    %v427 = vpack.c.b16 %v425, %v424
    %v431 = vsel %vm240, %v351, 0
    %v434 = vsel %vm240, %v352, 0
    %436 = vmatprep.subr.bf16.mxu0 0
    %437 = vmatpush1.bf16.msra.mxu0 %v426
    %438 = vmatprep.subr.bf16.mxu0 0
    %439 = vmatpush1.bf16.msra.mxu0 %v427
    %440 = vmatprep.subr.bf16.mxu0 0
    %441 = vmatpush1.bf16.msra.mxu0 0
    %442 = vmatprep.subr.bf16.mxu0 0
    %443 = vmatpush1.bf16.msra.mxu0 0
    %444 = vmatprep.subr.bf16.mxu0 0
    %445 = vmatpush1.bf16.msra.mxu0 0
    %446 = vmatprep.subr.bf16.mxu0 0
    %447 = vmatpush1.bf16.msra.mxu0 0
    %448 = vmatprep.subr.bf16.mxu0 0
    %449 = vmatpush1.bf16.msra.mxu0 0
    %450 = vmatprep.subr.bf16.mxu0 0
    %451 = vmatpush1.bf16.msra.mxu0 0
    %452 = vmatprep.subr.bf16.mxu0 0
    %453 = vmatpush1.bf16.msra.mxu0 0
    %454 = vmatprep.subr.bf16.mxu0 0
    %455 = vmatpush1.bf16.msra.mxu0 0
    %456 = vmatprep.subr.bf16.mxu0 0
    %457 = vmatpush1.bf16.msra.mxu0 0
    %458 = vmatprep.subr.bf16.mxu0 0
    %459 = vmatpush1.bf16.msra.mxu0 0
    %460 = vmatprep.subr.bf16.mxu0 0
    %461 = vmatpush1.bf16.msra.mxu0 0
    %462 = vmatprep.subr.bf16.mxu0 0
    %463 = vmatpush1.bf16.msra.mxu0 0
    %464 = vmatprep.subr.bf16.mxu0 0
    %465 = vmatpush1.bf16.msra.mxu0 0
    %466 = vmatprep.subr.bf16.mxu0 0
    %467 = vmatpush1.bf16.msra.mxu0 0
    %468 = vmatprep.mubr.bf16.mxu0 0
    %469 = vmatmul.mubr.bf16.gmra.mrb[0].mxu0 %v431
    %v470 = vpop.f32.mrb[0].mxu0
    %v471 = vadd.f32 %v405, %v470
    %v472 = vpop.f32.mrb[0].mxu0
    %v473 = vpop.f32.mrb[0].mxu0
    %v474 = vadd.f32 %v408, %v473
    %v475 = vpop.f32.mrb[0].mxu0
    %476 = vmatprep.mubr.bf16.mxu0 0
    %477 = vmatmul.mubr.bf16.gmra.mrb[0].mxu0 %v434
    %v478 = vpop.f32.mrb[0].mxu0
    %v479 = vadd.f32 %v413, %v478
    %v480 = vpop.f32.mrb[0].mxu0
    %v481 = vpop.f32.mrb[0].mxu0
    %v482 = vpop.f32.mrb[0].mxu0
    %483 = vdwg.mxu0
    %v484 = vlaneseq
    %v485 = vshrl.u32 %v484, 7
    %v486 = vsub.s32 3, %v485
    %v487 = vrot.slane %v25, %v486
    %v488 = vadd.f32 %v471, %v487
    %v489 = vadd.f32 %v474, %v487
    %v490 = vadd.f32 %v479, %v487
    %v491 = vlaneseq
    %v492 = vshrl.u32 %v491, 7
    %v493 = vsub.s32 0, %v492
    %v494 = vrot.slane %v19, %v493
    %s496 = sor.u32 256, 16
    %497 = vbcast.lane.b32.xlu0 %v494, %s496
    %v498 = vpop.permute.xlu0 %497
    %v499 = vlaneseq
    %v500 = vshrl.u32 %v499, 7
    %v501 = vsub.s32 1, %v500
    %v502 = vrot.slane %v19, %v501
    %s504 = sor.u32 256, 16
    %505 = vbcast.lane.b32.xlu0 %v502, %s504
    %v506 = vpop.permute.xlu0 %505
    %v507 = vlaneseq
    %v508 = vshrl.u32 %v507, 7
    %v509 = vsub.s32 2, %v508
    %v510 = vrot.slane %v19, %v509
    %s512 = sor.u32 256, 16
    %513 = vbcast.lane.b32.xlu0 %v510, %s512
    %v514 = vpop.permute.xlu0 %513
    %v515 = vlaneseq
    %v516 = vshrl.u32 %v515, 7
    %v517 = vsub.s32 3, %v516
    %v518 = vrot.slane %v19, %v517
    %s520 = sor.u32 256, 16
    %521 = vbcast.lane.b32.xlu0 %v518, %s520
    %v522 = vpop.permute.xlu0 %521
    %v523 = vlaneseq
    %v524 = vshrl.u32 %v523, 7
    %v525 = vsub.s32 4, %v524
    %v526 = vrot.slane %v19, %v525
    %s528 = sor.u32 256, 16
    %529 = vbcast.lane.b32.xlu0 %v526, %s528
    %v530 = vpop.permute.xlu0 %529
    %v531 = vlaneseq
    %v532 = vshrl.u32 %v531, 7
    %v533 = vsub.s32 5, %v532
    %v534 = vrot.slane %v19, %v533
    %s536 = sor.u32 256, 16
    %537 = vbcast.lane.b32.xlu0 %v534, %s536
    %v538 = vpop.permute.xlu0 %537
    %v539 = vlaneseq
    %v540 = vshrl.u32 %v539, 7
    %v541 = vsub.s32 6, %v540
    %v542 = vrot.slane %v19, %v541
    %s544 = sor.u32 256, 16
    %545 = vbcast.lane.b32.xlu0 %v542, %s544
    %v546 = vpop.permute.xlu0 %545
    %v547 = vlaneseq
    %v548 = vshrl.u32 %v547, 7
    %v549 = vsub.s32 7, %v548
    %v550 = vrot.slane %v19, %v549
    %s552 = sor.u32 256, 16
    %553 = vbcast.lane.b32.xlu0 %v550, %s552
    %v554 = vpop.permute.xlu0 %553
    %v555 = vlaneseq
    %v556 = vshrl.u32 %v555, 7
    %v557 = vsub.s32 0, %v556
    %v558 = vrot.slane %v20, %v557
    %s560 = sor.u32 256, 16
    %561 = vbcast.lane.b32.xlu0 %v558, %s560
    %v562 = vpop.permute.xlu0 %561
    %v563 = vlaneseq
    %v564 = vshrl.u32 %v563, 7
    %v565 = vsub.s32 1, %v564
    %v566 = vrot.slane %v20, %v565
    %s568 = sor.u32 256, 16
    %569 = vbcast.lane.b32.xlu0 %v566, %s568
    %v570 = vpop.permute.xlu0 %569
    %v571 = vlaneseq
    %v572 = vshrl.u32 %v571, 7
    %v573 = vsub.s32 2, %v572
    %v574 = vrot.slane %v20, %v573
    %s576 = sor.u32 256, 16
    %577 = vbcast.lane.b32.xlu0 %v574, %s576
    %v578 = vpop.permute.xlu0 %577
    %v579 = vlaneseq
    %v580 = vshrl.u32 %v579, 7
    %v581 = vsub.s32 3, %v580
    %v582 = vrot.slane %v20, %v581
    %s584 = sor.u32 256, 16
    %585 = vbcast.lane.b32.xlu0 %v582, %s584
    %v586 = vpop.permute.xlu0 %585
    %v587 = vlaneseq
    %v588 = vshrl.u32 %v587, 7
    %v589 = vsub.s32 4, %v588
    %v590 = vrot.slane %v20, %v589
    %s592 = sor.u32 256, 16
    %593 = vbcast.lane.b32.xlu0 %v590, %s592
    %v594 = vpop.permute.xlu0 %593
    %v595 = vlaneseq
    %v596 = vshrl.u32 %v595, 7
    %v597 = vsub.s32 5, %v596
    %v598 = vrot.slane %v20, %v597
    %s600 = sor.u32 256, 16
    %601 = vbcast.lane.b32.xlu0 %v598, %s600
    %v602 = vpop.permute.xlu0 %601
    %v603 = vlaneseq
    %v604 = vshrl.u32 %v603, 7
    %v605 = vsub.s32 6, %v604
    %v606 = vrot.slane %v20, %v605
    %s608 = sor.u32 256, 16
    %609 = vbcast.lane.b32.xlu0 %v606, %s608
    %v610 = vpop.permute.xlu0 %609
    %v611 = vlaneseq
    %v612 = vshrl.u32 %v611, 7
    %v613 = vsub.s32 7, %v612
    %v614 = vrot.slane %v20, %v613
    %s616 = sor.u32 256, 16
    %617 = vbcast.lane.b32.xlu0 %v614, %s616
    %v618 = vpop.permute.xlu0 %617
    %v619 = vlaneseq
    %v620 = vshrl.u32 %v619, 7
    %v621 = vsub.s32 0, %v620
    %v622 = vrot.slane %v21, %v621
    %s624 = sor.u32 256, 16
    %625 = vbcast.lane.b32.xlu0 %v622, %s624
    %v626 = vpop.permute.xlu0 %625
    %v627 = vlaneseq
    %v628 = vshrl.u32 %v627, 7
    %v629 = vsub.s32 1, %v628
    %v630 = vrot.slane %v21, %v629
    %s632 = sor.u32 256, 16
    %633 = vbcast.lane.b32.xlu0 %v630, %s632
    %v634 = vpop.permute.xlu0 %633
    %v635 = vlaneseq
    %v636 = vshrl.u32 %v635, 7
    %v637 = vsub.s32 2, %v636
    %v638 = vrot.slane %v21, %v637
    %s640 = sor.u32 256, 16
    %641 = vbcast.lane.b32.xlu0 %v638, %s640
    %v642 = vpop.permute.xlu0 %641
    %v643 = vlaneseq
    %v644 = vshrl.u32 %v643, 7
    %v645 = vsub.s32 3, %v644
    %v646 = vrot.slane %v21, %v645
    %s648 = sor.u32 256, 16
    %649 = vbcast.lane.b32.xlu0 %v646, %s648
    %v650 = vpop.permute.xlu0 %649
    %v651 = vlaneseq
    %v652 = vshrl.u32 %v651, 7
    %v653 = vsub.s32 4, %v652
    %v654 = vrot.slane %v21, %v653
    %s656 = sor.u32 256, 16
    %657 = vbcast.lane.b32.xlu0 %v654, %s656
    %v658 = vpop.permute.xlu0 %657
    %v659 = vlaneseq
    %v660 = vshrl.u32 %v659, 7
    %v661 = vsub.s32 5, %v660
    %v662 = vrot.slane %v21, %v661
    %s664 = sor.u32 256, 16
    %665 = vbcast.lane.b32.xlu0 %v662, %s664
    %v666 = vpop.permute.xlu0 %665
    %v667 = vlaneseq
    %v668 = vshrl.u32 %v667, 7
    %v669 = vsub.s32 6, %v668
    %v670 = vrot.slane %v21, %v669
    %s672 = sor.u32 256, 16
    %673 = vbcast.lane.b32.xlu0 %v670, %s672
    %v674 = vpop.permute.xlu0 %673
    %v675 = vlaneseq
    %v676 = vshrl.u32 %v675, 7
    %v677 = vsub.s32 7, %v676
    %v678 = vrot.slane %v21, %v677
    %s680 = sor.u32 256, 16
    %681 = vbcast.lane.b32.xlu0 %v678, %s680
    %v682 = vpop.permute.xlu0 %681
    %vm683 = vcmp.gt.f32.partialorder %v498, 0.0
    %vm684 = vcmp.gt.f32.partialorder %v506, 0.0
    %vm685 = vcmp.gt.f32.partialorder %v514, 0.0
    %vm686 = vcmp.gt.f32.partialorder %v522, 0.0
    %vm687 = vcmp.gt.f32.partialorder %v530, 0.0
    %vm688 = vcmp.gt.f32.partialorder %v538, 0.0
    %vm689 = vcmp.gt.f32.partialorder %v546, 0.0
    %vm690 = vcmp.gt.f32.partialorder %v554, 0.0
    %vm691 = vcmp.gt.f32.partialorder %v562, 0.0
    %vm692 = vcmp.gt.f32.partialorder %v570, 0.0
    %vm693 = vcmp.gt.f32.partialorder %v578, 0.0
    %vm694 = vcmp.gt.f32.partialorder %v586, 0.0
    %vm695 = vcmp.gt.f32.partialorder %v594, 0.0
    %vm696 = vcmp.gt.f32.partialorder %v602, 0.0
    %vm697 = vcmp.gt.f32.partialorder %v610, 0.0
    %vm698 = vcmp.gt.f32.partialorder %v618, 0.0
    %vm699 = vcmp.gt.f32.partialorder %v626, 0.0
    %vm700 = vcmp.gt.f32.partialorder %v634, 0.0
    %vm701 = vcmp.gt.f32.partialorder %v642, 0.0
    %vm702 = vcmp.gt.f32.partialorder %v650, 0.0
    %vm703 = vcmp.gt.f32.partialorder %v658, 0.0
    %vm704 = vcmp.gt.f32.partialorder %v666, 0.0
    %vm705 = vcmp.gt.f32.partialorder %v674, 0.0
    %vm706 = vcmp.gt.f32.partialorder %v682, 0.0
    %v710 = vcombine.high %v488, %v488
    %v712 = vunpack.c.l.s4 1966171168
    %v713 = vunpack.c.0.s8 %v712
    %v714 = vlaneseq
    %v715 = vshrl.u32 %v714, 7
    %v716 = vsub.s32 %v713, %v715
    %v717 = vrot.slane %v488, %v716
    %v719 = vunpack.c.l.s4 1966171168
    %v720 = vunpack.c.0.s8 %v719
    %v721 = vlaneseq
    %v722 = vshrl.u32 %v721, 7
    %v723 = vsub.s32 %v720, %v722
    %v724 = vrot.slane %v710, %v723
    %v725 = vcombine.high %v717, %v717
    %v726 = vcombine.high %v724, %v724
    %v728 = vunpack.c.l.s4 1966171168
    %v729 = vunpack.c.0.s8 %v728
    %v730 = vlaneseq
    %v731 = vshrl.u32 %v730, 7
    %v732 = vsub.s32 %v729, %v731
    %v733 = vrot.slane %v717, %v732
    %v735 = vunpack.c.l.s4 1966171168
    %v736 = vunpack.c.0.s8 %v735
    %v737 = vlaneseq
    %v738 = vshrl.u32 %v737, 7
    %v739 = vsub.s32 %v736, %v738
    %v740 = vrot.slane %v724, %v739
    %v742 = vunpack.c.l.s4 1966171168
    %v743 = vunpack.c.0.s8 %v742
    %v744 = vlaneseq
    %v745 = vshrl.u32 %v744, 7
    %v746 = vsub.s32 %v743, %v745
    %v747 = vrot.slane %v725, %v746
    %v749 = vunpack.c.l.s4 1966171168
    %v750 = vunpack.c.0.s8 %v749
    %v751 = vlaneseq
    %v752 = vshrl.u32 %v751, 7
    %v753 = vsub.s32 %v750, %v752
    %v754 = vrot.slane %v726, %v753
    %v755 = vcombine.high %v733, %v733
    %v756 = vcombine.high %v740, %v740
    %v757 = vcombine.high %v747, %v747
    %v758 = vcombine.high %v754, %v754
    %v759 = vcombine.high %v489, %v489
    %v761 = vunpack.c.l.s4 1966171168
    %v762 = vunpack.c.0.s8 %v761
    %v763 = vlaneseq
    %v764 = vshrl.u32 %v763, 7
    %v765 = vsub.s32 %v762, %v764
    %v766 = vrot.slane %v489, %v765
    %v768 = vunpack.c.l.s4 1966171168
    %v769 = vunpack.c.0.s8 %v768
    %v770 = vlaneseq
    %v771 = vshrl.u32 %v770, 7
    %v772 = vsub.s32 %v769, %v771
    %v773 = vrot.slane %v759, %v772
    %v774 = vcombine.high %v766, %v766
    %v775 = vcombine.high %v773, %v773
    %v777 = vunpack.c.l.s4 1966171168
    %v778 = vunpack.c.0.s8 %v777
    %v779 = vlaneseq
    %v780 = vshrl.u32 %v779, 7
    %v781 = vsub.s32 %v778, %v780
    %v782 = vrot.slane %v766, %v781
    %v784 = vunpack.c.l.s4 1966171168
    %v785 = vunpack.c.0.s8 %v784
    %v786 = vlaneseq
    %v787 = vshrl.u32 %v786, 7
    %v788 = vsub.s32 %v785, %v787
    %v789 = vrot.slane %v773, %v788
    %v791 = vunpack.c.l.s4 1966171168
    %v792 = vunpack.c.0.s8 %v791
    %v793 = vlaneseq
    %v794 = vshrl.u32 %v793, 7
    %v795 = vsub.s32 %v792, %v794
    %v796 = vrot.slane %v774, %v795
    %v798 = vunpack.c.l.s4 1966171168
    %v799 = vunpack.c.0.s8 %v798
    %v800 = vlaneseq
    %v801 = vshrl.u32 %v800, 7
    %v802 = vsub.s32 %v799, %v801
    %v803 = vrot.slane %v775, %v802
    %v804 = vcombine.high %v782, %v782
    %v805 = vcombine.high %v789, %v789
    %v806 = vcombine.high %v796, %v796
    %v807 = vcombine.high %v803, %v803
    %v808 = vcombine.high %v490, %v490
    %v810 = vunpack.c.l.s4 1966171168
    %v811 = vunpack.c.0.s8 %v810
    %v812 = vlaneseq
    %v813 = vshrl.u32 %v812, 7
    %v814 = vsub.s32 %v811, %v813
    %v815 = vrot.slane %v490, %v814
    %v817 = vunpack.c.l.s4 1966171168
    %v818 = vunpack.c.0.s8 %v817
    %v819 = vlaneseq
    %v820 = vshrl.u32 %v819, 7
    %v821 = vsub.s32 %v818, %v820
    %v822 = vrot.slane %v808, %v821
    %v823 = vcombine.high %v815, %v815
    %v824 = vcombine.high %v822, %v822
    %v826 = vunpack.c.l.s4 1966171168
    %v827 = vunpack.c.0.s8 %v826
    %v828 = vlaneseq
    %v829 = vshrl.u32 %v828, 7
    %v830 = vsub.s32 %v827, %v829
    %v831 = vrot.slane %v815, %v830
    %v833 = vunpack.c.l.s4 1966171168
    %v834 = vunpack.c.0.s8 %v833
    %v835 = vlaneseq
    %v836 = vshrl.u32 %v835, 7
    %v837 = vsub.s32 %v834, %v836
    %v838 = vrot.slane %v822, %v837
    %v840 = vunpack.c.l.s4 1966171168
    %v841 = vunpack.c.0.s8 %v840
    %v842 = vlaneseq
    %v843 = vshrl.u32 %v842, 7
    %v844 = vsub.s32 %v841, %v843
    %v845 = vrot.slane %v823, %v844
    %v847 = vunpack.c.l.s4 1966171168
    %v848 = vunpack.c.0.s8 %v847
    %v849 = vlaneseq
    %v850 = vshrl.u32 %v849, 7
    %v851 = vsub.s32 %v848, %v850
    %v852 = vrot.slane %v824, %v851
    %v853 = vcombine.high %v831, %v831
    %v854 = vcombine.high %v838, %v838
    %v855 = vcombine.high %v845, %v845
    %v856 = vcombine.high %v852, %v852
    %v857 = vsel %vm683, 1, 0
    %v858 = vsel %vm684, 1, 0
    %v859 = vsel %vm685, 1, 0
    %v860 = vsel %vm686, 1, 0
    %v861 = vsel %vm687, 1, 0
    %v862 = vsel %vm688, 1, 0
    %v863 = vsel %vm689, 1, 0
    %v864 = vsel %vm690, 1, 0
    %v865 = vsel %vm691, 1, 0
    %v866 = vsel %vm692, 1, 0
    %v867 = vsel %vm693, 1, 0
    %v868 = vsel %vm694, 1, 0
    %v869 = vsel %vm695, 1, 0
    %v870 = vsel %vm696, 1, 0
    %v871 = vsel %vm697, 1, 0
    %v872 = vsel %vm698, 1, 0
    %v873 = vsel %vm699, 1, 0
    %v874 = vsel %vm700, 1, 0
    %v875 = vsel %vm701, 1, 0
    %v876 = vsel %vm702, 1, 0
    %v877 = vsel %vm703, 1, 0
    %v878 = vsel %vm704, 1, 0
    %v879 = vsel %vm705, 1, 0
    %v880 = vsel %vm706, 1, 0
    %vm881 = vcmp.eq.s32.totalorder %v857, 1
    %vm882 = vcmp.eq.s32.totalorder %v858, 1
    %vm883 = vcmp.eq.s32.totalorder %v859, 1
    %vm884 = vcmp.eq.s32.totalorder %v860, 1
    %vm885 = vcmp.eq.s32.totalorder %v861, 1
    %vm886 = vcmp.eq.s32.totalorder %v862, 1
    %vm887 = vcmp.eq.s32.totalorder %v863, 1
    %vm888 = vcmp.eq.s32.totalorder %v864, 1
    %vm889 = vcmp.eq.s32.totalorder %v865, 1
    %vm890 = vcmp.eq.s32.totalorder %v866, 1
    %vm891 = vcmp.eq.s32.totalorder %v867, 1
    %vm892 = vcmp.eq.s32.totalorder %v868, 1
    %vm893 = vcmp.eq.s32.totalorder %v869, 1
    %vm894 = vcmp.eq.s32.totalorder %v870, 1
    %vm895 = vcmp.eq.s32.totalorder %v871, 1
    %vm896 = vcmp.eq.s32.totalorder %v872, 1
    %vm897 = vcmp.eq.s32.totalorder %v873, 1
    %vm898 = vcmp.eq.s32.totalorder %v874, 1
    %vm899 = vcmp.eq.s32.totalorder %v875, 1
    %vm900 = vcmp.eq.s32.totalorder %v876, 1
    %vm901 = vcmp.eq.s32.totalorder %v877, 1
    %vm902 = vcmp.eq.s32.totalorder %v878, 1
    %vm903 = vcmp.eq.s32.totalorder %v879, 1
    %vm904 = vcmp.eq.s32.totalorder %v880, 1
    %v905 = vlaneseq
    %v906 = vshrl.u32 %v905, 7
    %v907 = vsub.s32 0, %v906
    %v908 = vrot.slane %v733, %v907
    %v909 = vlaneseq
    %v910 = vshrl.u32 %v909, 7
    %v911 = vsub.s32 0, %v910
    %v912 = vrot.slane %v747, %v911
    %v913 = vlaneseq
    %v914 = vshrl.u32 %v913, 7
    %v915 = vsub.s32 0, %v914
    %v916 = vrot.slane %v755, %v915
    %v917 = vlaneseq
    %v918 = vshrl.u32 %v917, 7
    %v919 = vsub.s32 0, %v918
    %v920 = vrot.slane %v757, %v919
    %v921 = vlaneseq
    %v922 = vshrl.u32 %v921, 7
    %v923 = vsub.s32 0, %v922
    %v924 = vrot.slane %v740, %v923
    %v925 = vlaneseq
    %v926 = vshrl.u32 %v925, 7
    %v927 = vsub.s32 0, %v926
    %v928 = vrot.slane %v754, %v927
    %v929 = vlaneseq
    %v930 = vshrl.u32 %v929, 7
    %v931 = vsub.s32 0, %v930
    %v932 = vrot.slane %v756, %v931
    %v933 = vlaneseq
    %v934 = vshrl.u32 %v933, 7
    %v935 = vsub.s32 0, %v934
    %v936 = vrot.slane %v758, %v935
    %v937 = vlaneseq
    %v938 = vshrl.u32 %v937, 7
    %v939 = vsub.s32 0, %v938
    %v940 = vrot.slane %v782, %v939
    %v941 = vlaneseq
    %v942 = vshrl.u32 %v941, 7
    %v943 = vsub.s32 0, %v942
    %v944 = vrot.slane %v796, %v943
    %v945 = vlaneseq
    %v946 = vshrl.u32 %v945, 7
    %v947 = vsub.s32 0, %v946
    %v948 = vrot.slane %v804, %v947
    %v949 = vlaneseq
    %v950 = vshrl.u32 %v949, 7
    %v951 = vsub.s32 0, %v950
    %v952 = vrot.slane %v806, %v951
    %v953 = vlaneseq
    %v954 = vshrl.u32 %v953, 7
    %v955 = vsub.s32 0, %v954
    %v956 = vrot.slane %v789, %v955
    %v957 = vlaneseq
    %v958 = vshrl.u32 %v957, 7
    %v959 = vsub.s32 0, %v958
    %v960 = vrot.slane %v803, %v959
    %v961 = vlaneseq
    %v962 = vshrl.u32 %v961, 7
    %v963 = vsub.s32 0, %v962
    %v964 = vrot.slane %v805, %v963
    %v965 = vlaneseq
    %v966 = vshrl.u32 %v965, 7
    %v967 = vsub.s32 0, %v966
    %v968 = vrot.slane %v807, %v967
    %v969 = vlaneseq
    %v970 = vshrl.u32 %v969, 7
    %v971 = vsub.s32 0, %v970
    %v972 = vrot.slane %v831, %v971
    %v973 = vlaneseq
    %v974 = vshrl.u32 %v973, 7
    %v975 = vsub.s32 0, %v974
    %v976 = vrot.slane %v845, %v975
    %v977 = vlaneseq
    %v978 = vshrl.u32 %v977, 7
    %v979 = vsub.s32 0, %v978
    %v980 = vrot.slane %v853, %v979
    %v981 = vlaneseq
    %v982 = vshrl.u32 %v981, 7
    %v983 = vsub.s32 0, %v982
    %v984 = vrot.slane %v855, %v983
    %v985 = vlaneseq
    %v986 = vshrl.u32 %v985, 7
    %v987 = vsub.s32 0, %v986
    %v988 = vrot.slane %v838, %v987
    %v989 = vlaneseq
    %v990 = vshrl.u32 %v989, 7
    %v991 = vsub.s32 0, %v990
    %v992 = vrot.slane %v852, %v991
    %v993 = vlaneseq
    %v994 = vshrl.u32 %v993, 7
    %v995 = vsub.s32 0, %v994
    %v996 = vrot.slane %v854, %v995
    %v997 = vlaneseq
    %v998 = vshrl.u32 %v997, 7
    %v999 = vsub.s32 0, %v998
    %v1000 = vrot.slane %v856, %v999
    %v1025 = vsel %vm881, %v908, -1e+30
    %v1026 = vsel %vm882, %v912, -1e+30
    %v1027 = vsel %vm883, %v916, -1e+30
    %v1028 = vsel %vm884, %v920, -1e+30
    %v1029 = vsel %vm885, %v924, -1e+30
    %v1030 = vsel %vm886, %v928, -1e+30
    %v1031 = vsel %vm887, %v932, -1e+30
    %v1032 = vsel %vm888, %v936, -1e+30
    %v1033 = vsel %vm889, %v940, -1e+30
    %v1034 = vsel %vm890, %v944, -1e+30
    %v1035 = vsel %vm891, %v948, -1e+30
    %v1036 = vsel %vm892, %v952, -1e+30
    %v1037 = vsel %vm893, %v956, -1e+30
    %v1038 = vsel %vm894, %v960, -1e+30
    %v1039 = vsel %vm895, %v964, -1e+30
    %v1040 = vsel %vm896, %v968, -1e+30
    %v1041 = vsel %vm897, %v972, -1e+30
    %v1042 = vsel %vm898, %v976, -1e+30
    %v1043 = vsel %vm899, %v980, -1e+30
    %v1044 = vsel %vm900, %v984, -1e+30
    %v1045 = vsel %vm901, %v988, -1e+30
    %v1046 = vsel %vm902, %v992, -1e+30
    %v1047 = vsel %vm903, %v996, -1e+30
    %v1048 = vsel %vm904, %v1000, -1e+30
    %vm1049 = vcmask 257024
    %v1050 = vsel %vm1049, %v1025, -inf
    %v1051 = vsel %vm1049, %v1026, -inf
    %v1052 = vsel %vm1049, %v1027, -inf
    %v1053 = vsel %vm1049, %v1028, -inf
    %v1054 = vsel %vm1049, %v1029, -inf
    %v1055 = vmax.f32 %v1050, %v1054
    %v1056 = vsel %vm1049, %v1030, -inf
    %v1057 = vmax.f32 %v1051, %v1056
    %v1058 = vsel %vm1049, %v1031, -inf
    %v1059 = vmax.f32 %v1052, %v1058
    %v1060 = vsel %vm1049, %v1032, -inf
    %v1061 = vmax.f32 %v1053, %v1060
    %v1062 = vsel %vm1049, %v1033, -inf
    %v1063 = vmax.f32 %v1055, %v1062
    %v1064 = vsel %vm1049, %v1034, -inf
    %v1065 = vmax.f32 %v1057, %v1064
    %v1066 = vsel %vm1049, %v1035, -inf
    %v1067 = vmax.f32 %v1059, %v1066
    %v1068 = vsel %vm1049, %v1036, -inf
    %v1069 = vmax.f32 %v1061, %v1068
    %v1070 = vsel %vm1049, %v1037, -inf
    %v1071 = vmax.f32 %v1063, %v1070
    %v1072 = vsel %vm1049, %v1038, -inf
    %v1073 = vmax.f32 %v1065, %v1072
    %v1074 = vsel %vm1049, %v1039, -inf
    %v1075 = vmax.f32 %v1067, %v1074
    %v1076 = vsel %vm1049, %v1040, -inf
    %v1077 = vmax.f32 %v1069, %v1076
    %v1078 = vsel %vm1049, %v1041, -inf
    %v1079 = vmax.f32 %v1071, %v1078
    %v1080 = vsel %vm1049, %v1042, -inf
    %v1081 = vmax.f32 %v1073, %v1080
    %v1082 = vsel %vm1049, %v1043, -inf
    %v1083 = vmax.f32 %v1075, %v1082
    %v1084 = vsel %vm1049, %v1044, -inf
    %v1085 = vmax.f32 %v1077, %v1084
    %v1086 = vsel %vm1049, %v1045, -inf
    %v1087 = vmax.f32 %v1079, %v1086
    %v1088 = vsel %vm1049, %v1046, -inf
    %v1089 = vmax.f32 %v1081, %v1088
    %v1090 = vsel %vm1049, %v1047, -inf
    %v1091 = vmax.f32 %v1083, %v1090
    %v1092 = vsel %vm1049, %v1048, -inf
    %v1093 = vmax.f32 %v1085, %v1092
    %v1094 = vmax.f32 %v1087, %v1089
    %v1095 = vmax.f32 %v1091, %v1093
    %v1096 = vmax.f32 %v1094, %v1095
    %v1097 = vpack.c.bf16 %v1096, %v1096
    %v1098 = vlaneseq
    %v1099 = vshrl.u32 %v1098, 7
    %v1100 = vsub.s32 4, %v1099
    %v1101 = vrot.slane %v25, %v1100
    %v1106 = vunpack.c.l.b16 %v38
    %v1107 = vunpack.c.l.b16 %v39
    %v1108 = vunpack.c.l.b16 %v40
    %v1109 = vunpack.c.l.b16 %v41
    %v1110 = vpack.c.b16 %v1107, %v1106
    %v1111 = vpack.c.b16 %v1109, %v1108
    %v1115 = vsel %vm240, %v1097, 0
    %1117 = vmatprep.subr.bf16.mxu0 0
    %1118 = vmatpush1.bf16.msra.mxu0 %v1110
    %1119 = vmatprep.subr.bf16.mxu0 0
    %1120 = vmatpush1.bf16.msra.mxu0 %v1111
    %1121 = vmatprep.subr.bf16.mxu0 0
    %1122 = vmatpush1.bf16.msra.mxu0 0
    %1123 = vmatprep.subr.bf16.mxu0 0
    %1124 = vmatpush1.bf16.msra.mxu0 0
    %1125 = vmatprep.subr.bf16.mxu0 0
    %1126 = vmatpush1.bf16.msra.mxu0 0
    %1127 = vmatprep.subr.bf16.mxu0 0
    %1128 = vmatpush1.bf16.msra.mxu0 0
    %1129 = vmatprep.subr.bf16.mxu0 0
    %1130 = vmatpush1.bf16.msra.mxu0 0
    %1131 = vmatprep.subr.bf16.mxu0 0
    %1132 = vmatpush1.bf16.msra.mxu0 0
    %1133 = vmatprep.subr.bf16.mxu0 0
    %1134 = vmatpush1.bf16.msra.mxu0 0
    %1135 = vmatprep.subr.bf16.mxu0 0
    %1136 = vmatpush1.bf16.msra.mxu0 0
    %1137 = vmatprep.subr.bf16.mxu0 0
    %1138 = vmatpush1.bf16.msra.mxu0 0
    %1139 = vmatprep.subr.bf16.mxu0 0
    %1140 = vmatpush1.bf16.msra.mxu0 0
    %1141 = vmatprep.subr.bf16.mxu0 0
    %1142 = vmatpush1.bf16.msra.mxu0 0
    %1143 = vmatprep.subr.bf16.mxu0 0
    %1144 = vmatpush1.bf16.msra.mxu0 0
    %1145 = vmatprep.subr.bf16.mxu0 0
    %1146 = vmatpush1.bf16.msra.mxu0 0
    %1147 = vmatprep.subr.bf16.mxu0 0
    %1148 = vmatpush1.bf16.msra.mxu0 0
    %1149 = vmatprep.mubr.bf16.mxu0 0
    %1150 = vmatmul.mubr.bf16.gmra.mrb[0].mxu0 %v1115
    %v1151 = vpop.f32.mrb[0].mxu0
    %v1152 = vadd.f32 %v1101, %v1151
    %v1153 = vpop.f32.mrb[0].mxu0
    %v1154 = vpop.f32.mrb[0].mxu0
    %v1155 = vpop.f32.mrb[0].mxu0
    %1156 = vdwg.mxu0
    %v1157 = vmax.f32 %v1152, 0.0
    %v1158 = vsel %vm1049, %v1157, 0.0
    %1159 = vadd.xlane.f32.xlu0 %v1158
    %v1160 = vpop.xlane.xlu0 %1159
    %v1161 = vmul.f32 %v1160, %v250
    %v1162 = vsub.f32 %v1157, %v1161
    %v1163 = vmul.f32 %v1162, %v1162
    %v1164 = vsel %vm1049, %v1163, 0.0
    %1165 = vadd.xlane.f32.xlu0 %v1164
    %v1166 = vpop.xlane.xlu0 %1165
    %v1167 = vmul.f32 %v1166, %v250
    %v1168 = vadd.f32 %v1167, 1e-05
    %v1169 = vrsqrt.pop %v1168
    %v1170 = vmul.f32 %v1162, %v1169
    %v1171 = vlaneseq
    %v1172 = vshrl.u32 %v1171, 7
    %v1173 = vsub.s32 5, %v1172
    %v1174 = vrot.slane %v25, %v1173
    %v1175 = vmul.f32 %v1170, %v1174
    %v1176 = vlaneseq
    %v1177 = vshrl.u32 %v1176, 7
    %v1178 = vsub.s32 6, %v1177
    %v1179 = vrot.slane %v25, %v1178
    %v1180 = vadd.f32 %v1175, %v1179
    %v1181 = vsel %vm240, %v1180, 0.0
    %1182 = vst [vmem:[#allocation2] sm:$0xf] %v1181
    // Predicated region
    $region18: #{drug_embed_forward.1} parent=1 // pred_check
      _
    $region19: #{drug_embed_forward.1} parent=1 // pred_check_branch
      %1184 = sbr.rel (0) target = $region21
    $region20: #{drug_embed_forward.1} parent=1 // pred_region
      %s1186 = ssub.s32 64, 64
      %1187 = vsyncadd [#allocation3], %s1186
      %s1189 = sshll.u32 [#allocation2], 4
      %s1190 = int_to_ptr.vmem [resolvable:$true] %s1189
      %1192 = dma.vmem_to_hbm [thread:$0]  %s1190, 64, %s4, [#allocation3]
    $region21: #{drug_embed_forward.1} parent=1 // pred_fallthru
      _
    // Predicated region
    $region22: #{drug_embed_forward.1} parent=1 // pred_check
      _
    $region23: #{drug_embed_forward.1} parent=1 // pred_check_branch
      %1194 = sbr.rel (0) target = $region25
    $region24: #{drug_embed_forward.1} parent=1 // pred_region
      %1195 = dma.done [#allocation3], 64
    $region25: #{drug_embed_forward.1} parent=1 // pred_fallthru
      _
    %1196 = vsyncpa [#allocation3], 1

</llo_original>
